<compile_context>
chip_gen: v5e
topology: v5e:2x2
jax: 0.10.0
libtpu: 0.0.40
codegen_flags: <defaults>
</compile_context>

<pallas_src>
import jax
import jax.numpy as jnp
from jax.experimental import pallas as pl
from jax.experimental.pallas import tpu as pltpu


def _round_up(x, m):
    return ((x + m - 1) // m) * m


def _cdiv(a, b):
    return -(-a // b)


def _vmem_capacity_bytes():
    try:
        return int(pltpu.get_tpu_info().vmem_capacity_bytes)
    except Exception:
        return 64 << 20  # conservative (v7x-sized) fallback


def mlp_multilabel_kernel(x_ref, w1_ref, b1_ref, w2_ref, b2_ref, o_ref, h_acc):
    # x_ref : [TB, TK]        f32 (cast to bf16 here, on the VPU)
    # w1_ref: [TK, H_pad]     bf16     b1_ref: [1, H_pad]   f32
    # w2_ref: [H_pad, D_pad]  bf16     b2_ref: [1, D_pad]   f32 (-1e30 in pad cols)
    # o_ref : [TB, D_pad]     f32      h_acc : [TB, H_pad]  f32 VMEM scratch
    k = pl.program_id(1)

    @pl.when(k == 0)
    def _():
        h_acc[...] = jnp.zeros_like(h_acc)

    # linear1 partial product (MXU, bf16 operands, f32 accumulation).
    x = x_ref[...].astype(jnp.bfloat16)
    h_acc[...] += jnp.dot(x, w1_ref[...], preferred_element_type=jnp.float32)

    @pl.when(k == pl.num_programs(1) - 1)
    def _():
        # bias + ReLU in f32.
        h = jnp.maximum(h_acc[...] + b1_ref[...], 0.0)

        # linear2 (MXU) + bias; zero-padded hidden rows of w2 contribute nothing.
        logits = jnp.dot(h.astype(jnp.bfloat16), w2_ref[...],
                         preferred_element_type=jnp.float32) + b2_ref[...]

        # Numerically stable softmax over dim=1; padded columns have logit
        # ~ -1e30, so exp underflows to exactly 0 after max-subtraction.
        m = jnp.max(logits, axis=1, keepdims=True)
        e = jnp.exp(logits - m)
        denom = jnp.sum(e, axis=1, keepdims=True)
        # denom is only [TB, 1] -> exact reciprocal is essentially free.
        o_ref[...] = (e * pl.reciprocal(denom, approx=False)).astype(o_ref.dtype)


def prepare_params(w1, b1, w2, b2, *, max_w1_block_bytes=16 << 20):
    """Cast + pad the parameters once (call at load time, not per forward).

    w1: [d_in, hidden]  b1: [hidden]  w2: [hidden, d_out]  b2: [d_out]
    """
    d_in, hidden = w1.shape
    d_out = w2.shape[1]
    assert w2.shape == (hidden, d_out)

    h_pad = _round_up(hidden, 128)
    dout_pad = _round_up(d_out, 128)

    # K (d_in) tiling: keep the w1 VMEM block bounded on 64 MiB (v7x) parts.
    w1_bytes = d_in * h_pad * 2  # bf16
    grid_k = max(1, _cdiv(w1_bytes, max_w1_block_bytes))
    if grid_k == 1:
        tk = d_in
    else:
        tk = _round_up(_cdiv(d_in, grid_k), 128)
        grid_k = _cdiv(d_in, tk)
    k_pad = grid_k * tk

    w1_p = jnp.pad(w1.astype(jnp.bfloat16),
                   ((0, k_pad - d_in), (0, h_pad - hidden)))
    b1_p = jnp.pad(b1.astype(jnp.float32), ((0, h_pad - hidden),)).reshape(1, h_pad)
    w2_p = jnp.pad(w2.astype(jnp.bfloat16),
                   ((0, h_pad - hidden), (0, dout_pad - d_out)))
    b2_p = jnp.pad(b2.astype(jnp.float32), ((0, dout_pad - d_out),),
                   constant_values=-1e30).reshape(1, dout_pad)

    return dict(w1=w1_p, b1=b1_p, w2=w2_p, b2=b2_p,
                d_in=d_in, hidden=hidden, d_out=d_out,
                h_pad=h_pad, dout_pad=dout_pad,
                tk=tk, grid_k=grid_k, k_pad=k_pad)


def mlp_multilabel_forward(x, params, *, max_batch_tile=None,
                           out_dtype=jnp.float32):
    """x: [B, ...] (flattened from dim 1). Returns softmax probs [B, d_out]."""
    B = x.shape[0]
    x2d = x.reshape(B, -1).astype(jnp.float32)
    d_in = params["d_in"]
    assert x2d.shape[1] == d_in, (x2d.shape, d_in)

    d_out = params["d_out"]
    h_pad, dout_pad = params["h_pad"], params["dout_pad"]
    tk, grid_k, k_pad = params["tk"], params["grid_k"], params["k_pad"]

    vmem_cap = _vmem_capacity_bytes()
    if max_batch_tile is None:
        # 128 MiB parts (v5e/v6e) can afford bigger batch tiles than v7x.
        max_batch_tile = 1024 if vmem_cap >= (96 << 20) else 512

    # Batch tile that hugs B (no ~2x padding waste), MXU-friendly alignment.
    num_b_tiles = max(1, _cdiv(B, max_batch_tile))
    rows_per_tile = _cdiv(B, num_b_tiles)
    align = 128 if rows_per_tile >= 128 else 8
    tb = _round_up(rows_per_tile, align)
    grid_b = _cdiv(B, tb)
    b_pad = grid_b * tb

    # x: native f32, padded only on batch (and K, if K-tiled) dims.
    x_p = jnp.pad(x2d, ((0, b_pad - B), (0, k_pad - d_in)))

    # VMEM budget from actual tile sizes (resident weights single-buffered).
    bytes_needed = (
        2 * tb * tk * 4                                 # x tile, f32, double-buffered
        + (2 if grid_k > 1 else 1) * tk * h_pad * 2     # w1 tile(s), bf16
        + h_pad * 4                                     # b1, resident
        + h_pad * dout_pad * 2                          # w2, resident
        + dout_pad * 4                                  # b2, resident
        + 2 * tb * dout_pad * 4                         # out tile, double-buffered
        + tb * h_pad * 4                                # hidden accumulator scratch
    )
    vmem_limit = min(max(int(1.5 * bytes_needed), 8 << 20),
                     int(0.75 * vmem_cap))

    w1_mode = pl.Buffered(2) if grid_k > 1 else pl.Buffered(1)

    out = pl.pallas_call(
        mlp_multilabel_kernel,
        out_shape=jax.ShapeDtypeStruct((b_pad, dout_pad), out_dtype),
        grid=(grid_b, grid_k),
        in_specs=[
            pl.BlockSpec((tb, tk), lambda i, k: (i, k)),            # x: streamed
            pl.BlockSpec((tk, h_pad), lambda i, k: (k, 0),
                         pipeline_mode=w1_mode),                    # w1
            pl.BlockSpec((1, h_pad), lambda i, k: (0, 0),
                         pipeline_mode=pl.Buffered(1)),             # b1: resident
            pl.BlockSpec((h_pad, dout_pad), lambda i, k: (0, 0),
                         pipeline_mode=pl.Buffered(1)),             # w2: resident
            pl.BlockSpec((1, dout_pad), lambda i, k: (0, 0),
                         pipeline_mode=pl.Buffered(1)),             # b2: resident
        ],
        out_specs=pl.BlockSpec((tb, dout_pad), lambda i, k: (i, 0)),
        scratch_shapes=[pltpu.VMEM((tb, h_pad), jnp.float32)],
        compiler_params=pltpu.CompilerParams(
            dimension_semantics=("parallel", "arbitrary"),
            vmem_limit_bytes=vmem_limit,
        ),
    )(x_p, params["w1"], params["b1"], params["w2"], params["b2"])

    return out[:B, :d_out]


if __name__ == "__main__":
    # Small shapes: x = [batch=2, channels=4, seq=16] -> input_dim = 64
    B, C, S = 2, 4, 16
    input_dim = C * S                            # 64
    output_dim = 8
    hidden_dim = (input_dim + output_dim) // 2   # 36

    key = jax.random.PRNGKey(0)
    kx, kw1, kb1, kw2, kb2 = jax.random.split(key, 5)

    x = jax.random.normal(kx, (B, C, S), dtype=jnp.float32)

    # PyTorch-style uniform init, stored as [in, out] (transposed vs nn.Linear).
    lim1 = 1.0 / (input_dim ** 0.5)
    w1 = jax.random.uniform(kw1, (input_dim, hidden_dim), jnp.float32, -lim1, lim1)
    b1 = jax.random.uniform(kb1, (hidden_dim,), jnp.float32, -lim1, lim1)
    lim2 = 1.0 / (hidden_dim ** 0.5)
    w2 = jax.random.uniform(kw2, (hidden_dim, output_dim), jnp.float32, -lim2, lim2)
    b2 = jax.random.uniform(kb2, (output_dim,), jnp.float32, -lim2, lim2)

    # One-time parameter prep (cast + pad), then the per-call forward.
    params = jax.tree.map(jax.block_until_ready,
                          prepare_params(w1, b1, w2, b2))
    out = jax.block_until_ready(mlp_multilabel_forward(x, params))

    # Precision-matched reference (same bf16 operand / f32 accumulate recipe).
    x2d = x.reshape(B, -1)
    h_m = jnp.maximum(
        jnp.dot(x2d.astype(jnp.bfloat16), w1.astype(jnp.bfloat16),
                preferred_element_type=jnp.float32) + b1, 0.0)
    logits_m = jnp.dot(h_m.astype(jnp.bfloat16), w2.astype(jnp.bfloat16),
                       preferred_element_type=jnp.float32) + b2
    ref_matched = jax.nn.softmax(logits_m, axis=1)

    # Full-f32 reference (original module semantics), looser tolerance (bf16 MXU).
    h_f = jnp.maximum(x2d @ w1 + b1, 0.0)
    ref_f32 = jax.nn.softmax(h_f @ w2 + b2, axis=1)

    assert out.shape == (B, output_dim)
    assert jnp.allclose(jnp.sum(out, axis=1), 1.0, atol=1e-4)
    assert jnp.allclose(out, ref_matched, atol=3e-3, rtol=3e-3)
    assert jnp.allclose(out, ref_f32, atol=3e-2, rtol=3e-2)

    print("KERNEL_OK")
</pallas_src>

<mosaic_0001>
module attributes {stable_mosaic.version = 11 : i64} {
  func.func @mlp_multilabel_kernel(%arg0: i32, %arg1: i32, %arg2: memref<8x64xf32, #tpu.memory_space<vmem>>, %arg3: memref<64x128xbf16, #tpu.memory_space<vmem>>, %arg4: memref<1x128xf32, #tpu.memory_space<vmem>>, %arg5: memref<128x128xbf16, #tpu.memory_space<vmem>>, %arg6: memref<1x128xf32, #tpu.memory_space<vmem>>, %arg7: memref<8x128xf32, #tpu.memory_space<vmem>>, %arg8: memref<8x128xf32, #tpu.memory_space<vmem>>) attributes {dimension_semantics = [#tpu.dimension_semantics<parallel>, #tpu.dimension_semantics<arbitrary>], iteration_bounds = array<i64: 1, 1>, scalar_prefetch = 0 : i64, scratch_operands = 1 : i64, tpu.core_type = #tpu.core_type<tc>, window_params = [{transform_indices = @transform_0, window_bounds = array<i64: 8, 64>}, {pipeline_mode = #tpu.pipeline_mode<synchronous>, transform_indices = @transform_1, window_bounds = array<i64: 64, 128>}, {pipeline_mode = #tpu.pipeline_mode<synchronous>, transform_indices = @transform_2, window_bounds = array<i64: 1, 128>}, {pipeline_mode = #tpu.pipeline_mode<synchronous>, transform_indices = @transform_3, window_bounds = array<i64: 128, 128>}, {pipeline_mode = #tpu.pipeline_mode<synchronous>, transform_indices = @transform_4, window_bounds = array<i64: 1, 128>}, {transform_indices = @transform_5, window_bounds = array<i64: 8, 128>}]} {
    %c0_i32 = arith.constant 0 : i32
    %0 = arith.cmpi eq, %arg1, %c0_i32 : i32
    %1 = arith.extui %0 : i1 to i32
    %c0_i32_0 = arith.constant 0 : i32
    %2 = arith.cmpi ne, %1, %c0_i32_0 : i32
    scf.if %2 {
      %cst_10 = arith.constant 0.000000e+00 : f32
      %13 = vector.broadcast %cst_10 : f32 to vector<8x128xf32>
      %c0_11 = arith.constant 0 : index
      %c0_12 = arith.constant 0 : index
      %14 = vector.load %arg8[%c0_11, %c0_12] : memref<8x128xf32, #tpu.memory_space<vmem>>, vector<8x128xf32>
      tpu.vector_store %arg8[%c0_11, %c0_12], %13 {strides = array<i32>} : memref<8x128xf32, #tpu.memory_space<vmem>>, vector<8x128xf32>,
    } else {
    }
    %c0 = arith.constant 0 : index
    %c0_1 = arith.constant 0 : index
    %3 = vector.load %arg2[%c0, %c0_1] : memref<8x64xf32, #tpu.memory_space<vmem>>, vector<8x64xf32>
    %4 = arith.truncf %3 : vector<8x64xf32> to vector<8x64xbf16>
    %c0_2 = arith.constant 0 : index
    %c0_3 = arith.constant 0 : index
    %5 = vector.load %arg8[%c0_2, %c0_3] : memref<8x128xf32, #tpu.memory_space<vmem>>, vector<8x128xf32>
    %c0_4 = arith.constant 0 : index
    %c0_5 = arith.constant 0 : index
    %6 = vector.load %arg3[%c0_4, %c0_5] : memref<64x128xbf16, #tpu.memory_space<vmem>>, vector<64x128xbf16>
    %cst = arith.constant dense<0.000000e+00> : vector<8x128xf32>
    %7 = tpu.matmul %4, %6, %cst {dimension_numbers = #tpu.dot_dimension_numbers<[1], [0], [0], [1], [0, 0, 1, 1], [], []>} : vector<8x64xbf16>, vector<64x128xbf16>, vector<8x128xf32> -> vector<8x128xf32>
    %8 = arith.addf %5, %7 : vector<8x128xf32>
    %c0_6 = arith.constant 0 : index
    %c0_7 = arith.constant 0 : index
    %9 = vector.load %arg8[%c0_6, %c0_7] : memref<8x128xf32, #tpu.memory_space<vmem>>, vector<8x128xf32>
    tpu.vector_store %arg8[%c0_6, %c0_7], %8 {strides = array<i32>} : memref<8x128xf32, #tpu.memory_space<vmem>>, vector<8x128xf32>,
    %c0_i32_8 = arith.constant 0 : i32
    %10 = arith.cmpi eq, %arg1, %c0_i32_8 : i32
    %11 = arith.extui %10 : i1 to i32
    %c0_i32_9 = arith.constant 0 : i32
    %12 = arith.cmpi ne, %11, %c0_i32_9 : i32
    scf.if %12 {
      %c0_10 = arith.constant 0 : index
      %c0_11 = arith.constant 0 : index
      %13 = vector.load %arg8[%c0_10, %c0_11] : memref<8x128xf32, #tpu.memory_space<vmem>>, vector<8x128xf32>
      %c0_12 = arith.constant 0 : index
      %c0_13 = arith.constant 0 : index
      %14 = vector.load %arg4[%c0_12, %c0_13] : memref<1x128xf32, #tpu.memory_space<vmem>>, vector<1x128xf32>
      %15 = vector.broadcast %14 : vector<1x128xf32> to vector<8x128xf32>
      %16 = arith.addf %13, %15 : vector<8x128xf32>
      %cst_14 = arith.constant 0.000000e+00 : f32
      %17 = vector.broadcast %cst_14 : f32 to vector<8x128xf32>
      %18 = arith.maximumf %16, %17 : vector<8x128xf32>
      %19 = arith.truncf %18 : vector<8x128xf32> to vector<8x128xbf16>
      %c0_15 = arith.constant 0 : index
      %c0_16 = arith.constant 0 : index
      %20 = vector.load %arg5[%c0_15, %c0_16] : memref<128x128xbf16, #tpu.memory_space<vmem>>, vector<128x128xbf16>
      %cst_17 = arith.constant dense<0.000000e+00> : vector<8x128xf32>
      %21 = tpu.matmul %19, %20, %cst_17 {dimension_numbers = #tpu.dot_dimension_numbers<[1], [0], [0], [1], [0, 0, 1, 1], [], []>} : vector<8x128xbf16>, vector<128x128xbf16>, vector<8x128xf32> -> vector<8x128xf32>
      %c0_18 = arith.constant 0 : index
      %c0_19 = arith.constant 0 : index
      %22 = vector.load %arg6[%c0_18, %c0_19] : memref<1x128xf32, #tpu.memory_space<vmem>>, vector<1x128xf32>
      %23 = vector.broadcast %22 : vector<1x128xf32> to vector<8x128xf32>
      %24 = arith.addf %21, %23 : vector<8x128xf32>
      %cst_20 = arith.constant dense<0xFF800000> : vector<8xf32>
      %25 = vector.multi_reduction <maximumf>, %24, %cst_20 [1] : vector<8x128xf32> to vector<8xf32>
      %26 = vector.shape_cast %25 : vector<8xf32> to vector<8x1xf32>
      %27 = vector.broadcast %26 : vector<8x1xf32> to vector<8x128xf32>
      %28 = arith.subf %24, %27 : vector<8x128xf32>
      %29 = math.exp %28 : vector<8x128xf32>
      %cst_21 = arith.constant dense<0.000000e+00> : vector<8xf32>
      %30 = vector.multi_reduction <add>, %29, %cst_21 [1] : vector<8x128xf32> to vector<8xf32>
      %31 = vector.shape_cast %30 : vector<8xf32> to vector<8x1xf32>
      %32 = tpu.reciprocal %31 : vector<8x1xf32> -> vector<8x1xf32>
      %33 = vector.broadcast %32 : vector<8x1xf32> to vector<8x128xf32>
      %34 = arith.mulf %29, %33 : vector<8x128xf32>
      %c0_22 = arith.constant 0 : index
      %c0_23 = arith.constant 0 : index
      %35 = vector.load %arg7[%c0_22, %c0_23] : memref<8x128xf32, #tpu.memory_space<vmem>>, vector<8x128xf32>
      tpu.vector_store %arg7[%c0_22, %c0_23], %34 {strides = array<i32>} : memref<8x128xf32, #tpu.memory_space<vmem>>, vector<8x128xf32>,
    } else {
    }
    return
  }
  func.func @transform_0(%arg0: i32, %arg1: i32) -> (i32, i32) {
    %c0_i32 = arith.constant 0 : i32
    return %arg0, %arg1 : i32, i32
  }
  func.func @transform_1(%arg0: i32, %arg1: i32) -> (i32, i32) {
    %c0_i32 = arith.constant 0 : i32
    %c0_i32_0 = arith.constant 0 : i32
    return %arg1, %c0_i32 : i32, i32
  }
  func.func @transform_2(%arg0: i32, %arg1: i32) -> (i32, i32) {
    %c0_i32 = arith.constant 0 : i32
    %c0_i32_0 = arith.constant 0 : i32
    %c0_i32_1 = arith.constant 0 : i32
    return %c0_i32, %c0_i32_0 : i32, i32
  }
  func.func @transform_3(%arg0: i32, %arg1: i32) -> (i32, i32) {
    %c0_i32 = arith.constant 0 : i32
    %c0_i32_0 = arith.constant 0 : i32
    %c0_i32_1 = arith.constant 0 : i32
    return %c0_i32, %c0_i32_0 : i32, i32
  }
  func.func @transform_4(%arg0: i32, %arg1: i32) -> (i32, i32) {
    %c0_i32 = arith.constant 0 : i32
    %c0_i32_0 = arith.constant 0 : i32
    %c0_i32_1 = arith.constant 0 : i32
    return %c0_i32, %c0_i32_0 : i32, i32
  }
  func.func @transform_5(%arg0: i32, %arg1: i32) -> (i32, i32) {
    %c0_i32 = arith.constant 0 : i32
    %c0_i32_0 = arith.constant 0 : i32
    return %arg0, %c0_i32 : i32, i32
  }
}

</mosaic_0001>

<llo_original>
// kernel: tpu_custom_call.1
$region0: #{tpu_custom_call.1}
  #allocation0 [shape = 'u32[]', space=smem, size = 0x4, offset = 0x4, fixed_abs, tag = 'smem constant byte address 0x4 - core index']
  #allocation1 [shape = 'u32[72,128]{1,0:T(1,128)}', space=vmem, size = 0x9000, scoped, tag = 'internal scratch']
  #allocation2 [shape = 'f32[8,128]{1,0:T(8,128)}', space=vmem, size = 0x1000, scoped, tag = 'scratch operand']
  %s0 = inlined_call_operand.hbm [shape: f32[8,64], index: 0, kind: input, shape index: {}]
  %s1 = inlined_call_operand.hbm [shape: bf16[64,128], index: 1, kind: input, shape index: {}]
  %s2 = inlined_call_operand.vmem [shape: f32[1,128], index: 2, kind: input, shape index: {}]
  %s3 = inlined_call_operand.hbm [shape: bf16[128,128], index: 3, kind: input, shape index: {}]
  %s4 = inlined_call_operand.vmem [shape: f32[1,128], index: 4, kind: input, shape index: {}]
  %s5 = inlined_call_operand.hbm [shape: f32[8,128], index: 5, kind: output, shape index: {}]
  %s6 = sld [smem:[#allocation0]]
  $region50: #{tpu_custom_call.1} parent=0
    _
  %s8 = ssub.s32 1, %s6
  %s9 = scalar_select 0, %s8, %s6
  $region1: #{tpu_custom_call.1} parent=0
    #allocation3 [shape = 'u8[4096]{0}', space=vmem, size = 0x1000, scoped, tag = 'input window, operand 0, single buffered']
    #allocation4 [shape = 's32[1]{0}', space=sflag, size = 0x4, scoped, tag = 'scoped memory for tpu_custom_call.1']
    #allocation5 [shape = 's32[1]{0}', space=sflag, size = 0x4, scoped, tag = 'scoped memory for tpu_custom_call.1']
    #allocation6 [shape = 'u8[16384]{0}', space=vmem, size = 0x4000, scoped, tag = 'input window, operand 1, single buffered']
    #allocation7 [shape = 's32[1]{0}', space=sflag, size = 0x4, scoped, tag = 'scoped memory for tpu_custom_call.1']
    #allocation8 [shape = 'u8[32768]{0}', space=vmem, size = 0x8000, scoped, tag = 'input window, operand 3, single buffered']
    #allocation9 [shape = 'u8[4096]{0}', space=vmem, size = 0x1000, scoped, tag = 'output window, operand 0, single buffered']
    %10 = vsyncpa [#allocation4], 0
    %11 = vsyncpa [#allocation7], 0
    %12 = vsyncpa [#allocation5], 0
    // Predicated region
    $region2: #{tpu_custom_call.1} parent=1 // pred_check
      _
    $region3: #{tpu_custom_call.1} parent=1 // pred_check_branch
      %14 = sbr.rel (0) target = $region5
    $region4: #{tpu_custom_call.1} parent=1 // pred_region
      %16 = vsyncadd [#allocation4], 0
      %s18 = sshll.u32 %s0, 4
      %s19 = int_to_ptr.hbm [resolvable:$true] %s18
      %s20 = sshll.u32 [#allocation3], 4
      %s21 = int_to_ptr.vmem [resolvable:$true] %s20
      %23 = dma.hbm_to_vmem [thread:$0]  %s19, 128, %s21, [#allocation4]
    $region5: #{tpu_custom_call.1} parent=1 // pred_fallthru
      _
    // Predicated region
    $region6: #{tpu_custom_call.1} parent=1 // pred_check
      _
    $region7: #{tpu_custom_call.1} parent=1 // pred_check_branch
      %25 = sbr.rel (0) target = $region9
    $region8: #{tpu_custom_call.1} parent=1 // pred_region
      %27 = vsyncadd [#allocation7], 0
      %s28 = sshll.u32 %s1, 4
      %s29 = int_to_ptr.hbm [resolvable:$true] %s28
      %s30 = sshll.u32 [#allocation6], 4
      %s31 = int_to_ptr.vmem [resolvable:$true] %s30
      %36 = dma.hbm_to_vmem [thread:$0]  %s29, 512, %s31, [#allocation7], 64, 64, 4
    $region9: #{tpu_custom_call.1} parent=1 // pred_fallthru
      _
    // Predicated region
    $region10: #{tpu_custom_call.1} parent=1 // pred_check
      _
    $region11: #{tpu_custom_call.1} parent=1 // pred_check_branch
      %38 = sbr.rel (0) target = $region13
    $region12: #{tpu_custom_call.1} parent=1 // pred_region
      _
    $region13: #{tpu_custom_call.1} parent=1 // pred_fallthru
      _
    // Predicated region
    $region14: #{tpu_custom_call.1} parent=1 // pred_check
      _
    $region15: #{tpu_custom_call.1} parent=1 // pred_check_branch
      %40 = sbr.rel (0) target = $region17
    $region16: #{tpu_custom_call.1} parent=1 // pred_region
      %42 = vsyncadd [#allocation7], 0
      %s43 = sshll.u32 %s3, 4
      %s44 = int_to_ptr.hbm [resolvable:$true] %s43
      %s45 = sshll.u32 [#allocation8], 4
      %s46 = int_to_ptr.vmem [resolvable:$true] %s45
      %51 = dma.hbm_to_vmem [thread:$0]  %s44, 1024, %s46, [#allocation7], 64, 64, 4
    $region17: #{tpu_custom_call.1} parent=1 // pred_fallthru
      _
    // Predicated region
    $region18: #{tpu_custom_call.1} parent=1 // pred_check
      _
    $region19: #{tpu_custom_call.1} parent=1 // pred_check_branch
      %53 = sbr.rel (0) target = $region21
    $region20: #{tpu_custom_call.1} parent=1 // pred_region
      _
    $region21: #{tpu_custom_call.1} parent=1 // pred_fallthru
      _
    // Predicated region
    $region22: #{tpu_custom_call.1} parent=1 // pred_check
      _
    $region23: #{tpu_custom_call.1} parent=1 // pred_check_branch
      %55 = sbr.rel (0) target = $region25
    $region24: #{tpu_custom_call.1} parent=1 // pred_region
      %57 = dma.done [#allocation4], 128
    $region25: #{tpu_custom_call.1} parent=1 // pred_fallthru
      _
    // Predicated region
    $region26: #{tpu_custom_call.1} parent=1 // pred_check
      _
    $region27: #{tpu_custom_call.1} parent=1 // pred_check_branch
      %59 = sbr.rel (0) target = $region29
    $region28: #{tpu_custom_call.1} parent=1 // pred_region
      %61 = dma.done [#allocation7], 512
    $region29: #{tpu_custom_call.1} parent=1 // pred_fallthru
      _
    // Predicated region
    $region30: #{tpu_custom_call.1} parent=1 // pred_check
      _
    $region31: #{tpu_custom_call.1} parent=1 // pred_check_branch
      %63 = sbr.rel (0) target = $region33
    $region32: #{tpu_custom_call.1} parent=1 // pred_region
      %65 = dma.done [#allocation7], 1024
    $region33: #{tpu_custom_call.1} parent=1 // pred_fallthru
      _
    %p67 = scmp.eq.s32.totalorder 0, 0
    // Predicated region
    $region34: #{tpu_custom_call.1} parent=1 // pred_check
      %p68 = pneg %p67
    $region35: #{tpu_custom_call.1} parent=1 // pred_check_branch
      %70 = sbr.rel (%p68) target = $region37
    $region36: #{tpu_custom_call.1} parent=1 // pred_region
      %71 = vst [vmem:[#allocation2] sm:$0xff] 0.0
    $region37: #{tpu_custom_call.1} parent=1 // pred_fallthru
      _
    %v72 = vld [vmem:[#allocation3] sm:$0xff]
    %v73 = vpack.c.bf16 %v72, %v72
    %v74 = vld [vmem:[#allocation2] sm:$0xff]
    %v75 = vld [vmem:[#allocation6] sm:$0xf]
    %v76 = vld [vmem:[#allocation6 + $0x4] sm:$0xf]
    %v77 = vld [vmem:[#allocation6 + $0x8] sm:$0xf]
    %v78 = vld [vmem:[#allocation6 + $0xc] sm:$0xf]
    %v79 = vld [vmem:[#allocation6 + $0x10] sm:$0xf]
    %v80 = vld [vmem:[#allocation6 + $0x14] sm:$0xf]
    %v81 = vld [vmem:[#allocation6 + $0x18] sm:$0xf]
    %v82 = vld [vmem:[#allocation6 + $0x1c] sm:$0xf]
    %v91 = vunpack.c.l.b16 %v75
    %v92 = vunpack.c.l.b16 %v76
    %v93 = vunpack.c.l.b16 %v77
    %v94 = vunpack.c.l.b16 %v78
    %v95 = vunpack.c.l.b16 %v79
    %v96 = vunpack.c.l.b16 %v80
    %v97 = vunpack.c.l.b16 %v81
    %v98 = vunpack.c.l.b16 %v82
    %v99 = vpack.c.b16 %v92, %v91
    %v100 = vpack.c.b16 %v94, %v93
    %v101 = vpack.c.b16 %v96, %v95
    %v102 = vpack.c.b16 %v98, %v97
    %vm107 = vcmask 523264
    %v109 = vsel %vm107, %v73, 0
    %111 = vmatpush.bf16.msra.mxu0 0
    %112 = vmatpush.bf16.msra.mxu0 0
    %113 = vmatpush.bf16.msra.mxu0 0
    %114 = vmatpush.bf16.msra.mxu0 0
    %115 = vmatpush.bf16.msra.mxu0 %v102
    %116 = vmatpush.bf16.msra.mxu0 %v101
    %117 = vmatpush.bf16.msra.mxu0 %v100
    %118 = vmatpush.bf16.msra.mxu0 %v99
    %119 = vmatmul.bf16.gmra.mxu0 %v109
    %v120 = vpop.f32.mrf.mxu0
    %v121 = vadd.f32 0.0, %v120
    %v122 = vpop.f32.mrf.mxu0
    %123 = vdwg.mxu0
    %v124 = vadd.f32 %v74, %v121
    %125 = vst [vmem:[#allocation2] sm:$0xff] %v124
    // Predicated region
    $region38: #{tpu_custom_call.1} parent=1 // pred_check
      %p126 = pneg %p67
    $region39: #{tpu_custom_call.1} parent=1 // pred_check_branch
      %128 = sbr.rel (%p126) target = $region41
    $region40: #{tpu_custom_call.1} parent=1 // pred_region
      %v129 = vld [vmem:[#allocation2] sm:$0xff]
      %v130 = vld [vmem:[%s2] sm:$0x1]
      %v132 = vperm.slane %v130, 0
      %v134 = vadd.f32 %v129, %v132
      %v135 = vmax.f32 %v134, 0.0
      %v136 = vpack.c.bf16 %v135, %v135
      %v137 = vld [vmem:[#allocation8] sm:$0xf]
      %v138 = vld [vmem:[#allocation8 + $0x4] sm:$0xf]
      %v139 = vld [vmem:[#allocation8 + $0x8] sm:$0xf]
      %v140 = vld [vmem:[#allocation8 + $0xc] sm:$0xf]
      %v141 = vld [vmem:[#allocation8 + $0x10] sm:$0xf]
      %v142 = vld [vmem:[#allocation8 + $0x14] sm:$0xf]
      %v143 = vld [vmem:[#allocation8 + $0x18] sm:$0xf]
      %v144 = vld [vmem:[#allocation8 + $0x1c] sm:$0xf]
      %v145 = vld [vmem:[#allocation8 + $0x20] sm:$0xf]
      %v146 = vld [vmem:[#allocation8 + $0x24] sm:$0xf]
      %v147 = vld [vmem:[#allocation8 + $0x28] sm:$0xf]
      %v148 = vld [vmem:[#allocation8 + $0x2c] sm:$0xf]
      %v149 = vld [vmem:[#allocation8 + $0x30] sm:$0xf]
      %v150 = vld [vmem:[#allocation8 + $0x34] sm:$0xf]
      %v151 = vld [vmem:[#allocation8 + $0x38] sm:$0xf]
      %v152 = vld [vmem:[#allocation8 + $0x3c] sm:$0xf]
      %v153 = vld [vmem:[%s4] sm:$0x1]
      %v155 = vperm.slane %v153, 0
      %v173 = vunpack.c.l.b16 %v137
      %v174 = vunpack.c.l.b16 %v138
      %v175 = vunpack.c.l.b16 %v139
      %v176 = vunpack.c.l.b16 %v140
      %v177 = vunpack.c.l.b16 %v141
      %v178 = vunpack.c.l.b16 %v142
      %v179 = vunpack.c.l.b16 %v143
      %v180 = vunpack.c.l.b16 %v144
      %v181 = vunpack.c.l.b16 %v145
      %v182 = vunpack.c.l.b16 %v146
      %v183 = vunpack.c.l.b16 %v147
      %v184 = vunpack.c.l.b16 %v148
      %v185 = vunpack.c.l.b16 %v149
      %v186 = vunpack.c.l.b16 %v150
      %v187 = vunpack.c.l.b16 %v151
      %v188 = vunpack.c.l.b16 %v152
      %v189 = vpack.c.b16 %v174, %v173
      %v190 = vpack.c.b16 %v176, %v175
      %v191 = vpack.c.b16 %v178, %v177
      %v192 = vpack.c.b16 %v180, %v179
      %v193 = vpack.c.b16 %v182, %v181
      %v194 = vpack.c.b16 %v184, %v183
      %v195 = vpack.c.b16 %v186, %v185
      %v196 = vpack.c.b16 %v188, %v187
      %205 = vmatpush.bf16.msra.mxu0 %v196
      %206 = vmatpush.bf16.msra.mxu0 %v195
      %207 = vmatpush.bf16.msra.mxu0 %v194
      %208 = vmatpush.bf16.msra.mxu0 %v193
      %209 = vmatpush.bf16.msra.mxu0 %v192
      %210 = vmatpush.bf16.msra.mxu0 %v191
      %211 = vmatpush.bf16.msra.mxu0 %v190
      %212 = vmatpush.bf16.msra.mxu0 %v189
      %213 = vmatmul.bf16.gmra.mxu0 %v136
      %v214 = vpop.f32.mrf.mxu0
      %v215 = vadd.f32 %v155, %v214
      %v216 = vpop.f32.mrf.mxu0
      %217 = vdwg.mxu0
      %218 = vmax.xlane.f32.xlu0 %v215
      %v219 = vpop.xlane.xlu0 %218
      %v220 = vsub.f32 %v215, %v219
      %v221 = vmul.f32 %v220, 1.442695
      %v222 = vpow.pop %v221
      %223 = vadd.xlane.f32.xlu0 %v222
      %v224 = vpop.xlane.xlu0 %223
      %v225 = vrcp.pop %v224
      %v226 = vmul.f32 %v224, %v225
      %v227 = vsub.f32 1.0, %v226
      %v228 = vmul.f32 %v225, %v227
      %v229 = vadd.f32 %v225, %v228
      %vm230 = vweird.f32 %v224
      %vm231 = vweird.f32 %v225
      %vm232 = vmor %vm230, %vm231
      %v233 = vsel %vm232, %v225, %v229
      %v234 = vand.u32 2147483647, %v224
      %vm235 = vcmp.eq.f32.partialorder %v234, 8.507059e+37
      %v236 = vand.u32 %v224, 2147483648
      %v237 = vor.u32 1.1754944e-38, %v236
      %v238 = vsel %vm235, %v237, %v233
      %v239 = vmul.f32 %v222, %v238
      %240 = vst [vmem:[#allocation9] sm:$0xff] %v239
    $region41: #{tpu_custom_call.1} parent=1 // pred_fallthru
      _
    // Predicated region
    $region42: #{tpu_custom_call.1} parent=1 // pred_check
      _
    $region43: #{tpu_custom_call.1} parent=1 // pred_check_branch
      %242 = sbr.rel (0) target = $region45
    $region44: #{tpu_custom_call.1} parent=1 // pred_region
      %244 = vsyncadd [#allocation5], 0
      %s246 = sshll.u32 [#allocation9], 4
      %s247 = int_to_ptr.vmem [resolvable:$true] %s246
      %s248 = sshll.u32 %s5, 4
      %s249 = int_to_ptr.hbm [resolvable:$true] %s248
      %251 = dma.vmem_to_hbm [thread:$0]  %s247, 128, %s249, [#allocation5]
    $region45: #{tpu_custom_call.1} parent=1 // pred_fallthru
      _
    // Predicated region
    $region46: #{tpu_custom_call.1} parent=1 // pred_check
      _
    $region47: #{tpu_custom_call.1} parent=1 // pred_check_branch
      %253 = sbr.rel (0) target = $region49
    $region48: #{tpu_custom_call.1} parent=1 // pred_region
      %255 = dma.done [#allocation5], 128
    $region49: #{tpu_custom_call.1} parent=1 // pred_fallthru
      _
    %256 = vsyncpa [#allocation4], 1
    %257 = vsyncpa [#allocation7], 1
    %258 = vsyncpa [#allocation5], 1

</llo_original>
